<compile_context>
chip_gen: v7x
topology: tpu7x:2x2x1
jax: 0.10.0
libtpu: 0.0.40
codegen_flags: <defaults>
</compile_context>

<pallas_src>
import jax
import jax.numpy as jnp
from jax.experimental import pallas as pl
from jax.experimental.pallas import tpu as pltpu


def _round_up(x, m):
    return ((x + m - 1) // m) * m


def _adjust_hsv_kernel(r_ref, x_ref, o_ref):
    # r_ref: SMEM (3,) float32 -> [r_hue, r_sat, r_val]
    # x_ref/o_ref: VMEM (1, 3, tile_rows, lane) float32, BGR order
    blue = x_ref[0, 0]
    green = x_ref[0, 1]
    red = x_ref[0, 2]

    # ---- BGR -> HSV (cv2 convention, hue stored as degrees / 2 in [0,180)) ----
    v = jnp.maximum(jnp.maximum(blue, green), red)
    mn = jnp.minimum(jnp.minimum(blue, green), red)
    diff = v - mn
    safe_diff = jnp.where(diff == 0.0, 1.0, diff)
    safe_v = jnp.where(v == 0.0, 1.0, v)
    inv_diff = pl.reciprocal(safe_diff, approx=True)   # EUP slot (otherwise idle)
    inv_v = pl.reciprocal(safe_v, approx=True)

    sat = jnp.where(v == 0.0, 0.0, diff * (255.0 * inv_v))

    h6 = jnp.where(
        v == red,
        (green - blue) * inv_diff,
        jnp.where(
            v == green,
            2.0 + (blue - red) * inv_diff,
            4.0 + (red - green) * inv_diff,
        ),
    )
    h6 = jnp.where(diff == 0.0, 0.0, h6)
    hue = h6 * 30.0                         # degrees * 0.5  (cv2 uint8 hue range)
    hue = jnp.where(hue < 0.0, hue + 180.0, hue)

    # ---- emulate the uint8 LUTs: x * r with mod / clip ----
    # TODO(synk): exact uint8 table quantization (int16 LUT + uint8 casts) is
    # approximated here with float rounding.
    rh = r_ref[0]
    rs = r_ref[1]
    rv = r_ref[2]
    hue2 = jnp.mod(jnp.round(hue) * rh, 180.0)
    sat2 = jnp.clip(jnp.round(sat) * rs, 0.0, 255.0)
    val2 = jnp.clip(jnp.round(v) * rv, 0.0, 255.0)

    # ---- HSV -> BGR, arithmetic sector formula ----
    #   chan = V - C * clip(min(k, 4 - k), 0, 1),  k = (n + H/60) mod 6
    #   n = 5 (R), 3 (G), 1 (B)
    c = val2 * (sat2 * (1.0 / 255.0))
    hp = hue2 * (1.0 / 30.0)                # (hue2 * 2 degrees) / 60

    def _chan(n):
        k = jnp.mod(hp + n, 6.0)
        t = jnp.clip(jnp.minimum(k, 4.0 - k), 0.0, 1.0)
        return val2 - c * t

    o_ref[0, 0] = _chan(1.0)   # blue
    o_ref[0, 1] = _chan(3.0)   # green
    o_ref[0, 2] = _chan(5.0)   # red


def adjust_hsv(image, h_factor=0.5, s_factor=0.5, v_factor=0.5, key=None):
    """image: (N, 3, H, W) float32, BGR, values in [0, 255]."""
    N, C, H, W = image.shape
    assert C == 3, "AdjustHsv expects a 3-channel (BGR) image"
    if key is None:
        key = jax.random.PRNGKey(0)
    u = jax.random.uniform(key, (3,), minval=-1.0, maxval=1.0, dtype=jnp.float32)
    r = u * jnp.array([h_factor, s_factor, v_factor], jnp.float32) + 1.0

    x = image.astype(jnp.float32)
    # TODO(synk): accept/emit uint8 to quarter HBM traffic on v5e/v6e.

    # ---- lane-dense spatial tiling: (H*W) -> (rows_pad, lane) ----
    LANE = 512            # lane width, multiple of 128
    MAX_TILE_ROWS = 256   # 256*512*4B = 512 KiB/channel -> 1.5 MiB per block
    hw = H * W
    lane = min(LANE, _round_up(hw, 128))
    rows = -(-hw // lane)
    tile_rows = min(MAX_TILE_ROWS, _round_up(rows, 8))
    rows_pad = _round_up(rows, tile_rows)
    hw_pad = rows_pad * lane

    flat = x.reshape(N, 3, hw)
    if hw_pad != hw:
        # Zero padding is safe: v == 0 path produces finite, discarded values.
        flat = jnp.pad(flat, ((0, 0), (0, 0), (0, hw_pad - hw)))
    tiled = flat.reshape(N, 3, rows_pad, lane)

    out = pl.pallas_call(
        _adjust_hsv_kernel,
        out_shape=jax.ShapeDtypeStruct((N, 3, rows_pad, lane), jnp.float32),
        grid=(N, rows_pad // tile_rows),
        in_specs=[
            pl.BlockSpec(memory_space=pltpu.SMEM),                      # r factors
            pl.BlockSpec((1, 3, tile_rows, lane), lambda n, t: (n, 0, t, 0)),
        ],
        out_specs=pl.BlockSpec((1, 3, tile_rows, lane), lambda n, t: (n, 0, t, 0)),
        compiler_params=pltpu.CompilerParams(
            dimension_semantics=("parallel", "parallel"),
        ),
    )(r, tiled)

    return out.reshape(N, 3, hw_pad)[:, :, :hw].reshape(N, 3, H, W)


if __name__ == "__main__":
    key = jax.random.PRNGKey(0)
    k_img, k_r = jax.random.split(key)
    # Small deterministic BGR image batch, values in [0, 255].
    image = jax.random.uniform(
        k_img, (2, 3, 16, 16), minval=0.0, maxval=255.0, dtype=jnp.float32
    )
    out = adjust_hsv(image, h_factor=0.5, s_factor=0.5, v_factor=0.5, key=k_r)
    jax.block_until_ready(out)
    assert out.shape == image.shape and out.dtype == jnp.float32
    assert bool(jnp.all(jnp.isfinite(out)))
    print("KERNEL_OK")
</pallas_src>

<mosaic_0001>
module attributes {stable_mosaic.version = 11 : i64} {
  func.func @_adjust_hsv_kernel(%arg0: i32, %arg1: i32, %arg2: memref<3xf32, #tpu.memory_space<smem>>, %arg3: memref<1x3x8x256xf32, #tpu.memory_space<vmem>>, %arg4: memref<1x3x8x256xf32, #tpu.memory_space<vmem>>) attributes {dimension_semantics = [#tpu.dimension_semantics<parallel>, #tpu.dimension_semantics<parallel>], iteration_bounds = array<i64: 2, 1>, scalar_prefetch = 0 : i64, scratch_operands = 0 : i64, tpu.core_type = #tpu.core_type<tc>, window_params = [{transform_indices = @transform_0, window_bounds = array<i64: 3>}, {transform_indices = @transform_1, window_bounds = array<i64: 1, 3, 8, 256>}, {transform_indices = @transform_2, window_bounds = array<i64: 1, 3, 8, 256>}]} {
    %c0 = arith.constant 0 : index
    %c0_0 = arith.constant 0 : index
    %c0_1 = arith.constant 0 : index
    %c0_2 = arith.constant 0 : index
    %0 = vector.load %arg3[%c0, %c0_0, %c0_1, %c0_2] : memref<1x3x8x256xf32, #tpu.memory_space<vmem>>, vector<1x1x8x256xf32>
    %1 = vector.shape_cast %0 : vector<1x1x8x256xf32> to vector<8x256xf32>
    %c0_3 = arith.constant 0 : index
    %c1 = arith.constant 1 : index
    %c0_4 = arith.constant 0 : index
    %c0_5 = arith.constant 0 : index
    %2 = vector.load %arg3[%c0_3, %c1, %c0_4, %c0_5] : memref<1x3x8x256xf32, #tpu.memory_space<vmem>>, vector<1x1x8x256xf32>
    %3 = vector.shape_cast %2 : vector<1x1x8x256xf32> to vector<8x256xf32>
    %c0_6 = arith.constant 0 : index
    %c2 = arith.constant 2 : index
    %c0_7 = arith.constant 0 : index
    %c0_8 = arith.constant 0 : index
    %4 = vector.load %arg3[%c0_6, %c2, %c0_7, %c0_8] : memref<1x3x8x256xf32, #tpu.memory_space<vmem>>, vector<1x1x8x256xf32>
    %5 = vector.shape_cast %4 : vector<1x1x8x256xf32> to vector<8x256xf32>
    %6 = arith.maximumf %1, %3 : vector<8x256xf32>
    %7 = arith.maximumf %6, %5 : vector<8x256xf32>
    %8 = arith.minimumf %1, %3 : vector<8x256xf32>
    %9 = arith.minimumf %8, %5 : vector<8x256xf32>
    %10 = arith.subf %7, %9 : vector<8x256xf32>
    %cst = arith.constant 0.000000e+00 : f32
    %11 = vector.broadcast %cst : f32 to vector<8x256xf32>
    %12 = arith.cmpf oeq, %10, %11 : vector<8x256xf32>
    %cst_9 = arith.constant 1.000000e+00 : f32
    %13 = vector.broadcast %cst_9 : f32 to vector<8x256xf32>
    %14 = arith.select %12, %13, %10 : vector<8x256xi1>, vector<8x256xf32>
    %cst_10 = arith.constant 0.000000e+00 : f32
    %15 = vector.broadcast %cst_10 : f32 to vector<8x256xf32>
    %16 = arith.cmpf oeq, %7, %15 : vector<8x256xf32>
    %cst_11 = arith.constant 1.000000e+00 : f32
    %17 = vector.broadcast %cst_11 : f32 to vector<8x256xf32>
    %18 = arith.select %16, %17, %7 : vector<8x256xi1>, vector<8x256xf32>
    %19 = tpu.reciprocal %14 {approx = true} : vector<8x256xf32> -> vector<8x256xf32>
    %20 = tpu.reciprocal %18 {approx = true} : vector<8x256xf32> -> vector<8x256xf32>
    %cst_12 = arith.constant 0.000000e+00 : f32
    %21 = vector.broadcast %cst_12 : f32 to vector<8x256xf32>
    %22 = arith.cmpf oeq, %7, %21 : vector<8x256xf32>
    %cst_13 = arith.constant 2.550000e+02 : f32
    %23 = vector.broadcast %cst_13 : f32 to vector<8x256xf32>
    %24 = arith.mulf %23, %20 : vector<8x256xf32>
    %25 = arith.mulf %10, %24 : vector<8x256xf32>
    %cst_14 = arith.constant 0.000000e+00 : f32
    %26 = vector.broadcast %cst_14 : f32 to vector<8x256xf32>
    %27 = arith.select %22, %26, %25 : vector<8x256xi1>, vector<8x256xf32>
    %28 = arith.cmpf oeq, %7, %5 : vector<8x256xf32>
    %29 = arith.subf %3, %1 : vector<8x256xf32>
    %30 = arith.mulf %29, %19 : vector<8x256xf32>
    %31 = arith.cmpf oeq, %7, %3 : vector<8x256xf32>
    %32 = arith.subf %1, %5 : vector<8x256xf32>
    %33 = arith.mulf %32, %19 : vector<8x256xf32>
    %cst_15 = arith.constant 2.000000e+00 : f32
    %34 = vector.broadcast %cst_15 : f32 to vector<8x256xf32>
    %35 = arith.addf %34, %33 : vector<8x256xf32>
    %36 = arith.subf %5, %3 : vector<8x256xf32>
    %37 = arith.mulf %36, %19 : vector<8x256xf32>
    %cst_16 = arith.constant 4.000000e+00 : f32
    %38 = vector.broadcast %cst_16 : f32 to vector<8x256xf32>
    %39 = arith.addf %38, %37 : vector<8x256xf32>
    %40 = arith.select %31, %35, %39 : vector<8x256xi1>, vector<8x256xf32>
    %41 = arith.select %28, %30, %40 : vector<8x256xi1>, vector<8x256xf32>
    %cst_17 = arith.constant 0.000000e+00 : f32
    %42 = vector.broadcast %cst_17 : f32 to vector<8x256xf32>
    %43 = arith.cmpf oeq, %10, %42 : vector<8x256xf32>
    %cst_18 = arith.constant 0.000000e+00 : f32
    %44 = vector.broadcast %cst_18 : f32 to vector<8x256xf32>
    %45 = arith.select %43, %44, %41 : vector<8x256xi1>, vector<8x256xf32>
    %cst_19 = arith.constant 3.000000e+01 : f32
    %46 = vector.broadcast %cst_19 : f32 to vector<8x256xf32>
    %47 = arith.mulf %45, %46 : vector<8x256xf32>
    %cst_20 = arith.constant 0.000000e+00 : f32
    %48 = vector.broadcast %cst_20 : f32 to vector<8x256xf32>
    %49 = arith.cmpf olt, %47, %48 : vector<8x256xf32>
    %cst_21 = arith.constant 1.800000e+02 : f32
    %50 = vector.broadcast %cst_21 : f32 to vector<8x256xf32>
    %51 = arith.addf %47, %50 : vector<8x256xf32>
    %52 = arith.select %49, %51, %47 : vector<8x256xi1>, vector<8x256xf32>
    %c0_22 = arith.constant 0 : index
    %53 = memref.load %arg2[%c0_22] : memref<3xf32, #tpu.memory_space<smem>>
    %c1_23 = arith.constant 1 : index
    %54 = memref.load %arg2[%c1_23] : memref<3xf32, #tpu.memory_space<smem>>
    %c2_24 = arith.constant 2 : index
    %55 = memref.load %arg2[%c2_24] : memref<3xf32, #tpu.memory_space<smem>>
    %56 = math.roundeven %52 : vector<8x256xf32>
    %57 = vector.broadcast %53 : f32 to vector<8x256xf32>
    %58 = arith.mulf %56, %57 : vector<8x256xf32>
    %cst_25 = arith.constant 1.800000e+02 : f32
    %59 = vector.broadcast %cst_25 : f32 to vector<8x256xf32>
    %60 = arith.remf %58, %59 : vector<8x256xf32>
    %cst_26 = arith.constant 0.000000e+00 : f32
    %61 = vector.broadcast %cst_26 : f32 to vector<8x256xf32>
    %62 = arith.cmpf one, %60, %61 : vector<8x256xf32>
    %cst_27 = arith.constant 0.000000e+00 : f32
    %63 = vector.broadcast %cst_27 : f32 to vector<8x256xf32>
    %64 = arith.cmpf olt, %60, %63 : vector<8x256xf32>
    %cst_28 = arith.constant 0.000000e+00 : f32
    %65 = arith.cmpf olt, %cst_25, %cst_28 : f32
    %66 = vector.broadcast %65 : i1 to vector<8x256xi1>
    %67 = vector.broadcast %66 : vector<8x256xi1> to vector<8x256xi1>
    %68 = arith.xori %64, %67 : vector<8x256xi1>
    %69 = arith.andi %68, %62 : vector<8x256xi1>
    %70 = vector.broadcast %cst_25 : f32 to vector<8x256xf32>
    %71 = arith.addf %60, %70 : vector<8x256xf32>
    %72 = arith.select %69, %71, %60 : vector<8x256xi1>, vector<8x256xf32>
    %73 = math.roundeven %27 : vector<8x256xf32>
    %74 = vector.broadcast %54 : f32 to vector<8x256xf32>
    %75 = arith.mulf %73, %74 : vector<8x256xf32>
    %cst_29 = arith.constant 0.000000e+00 : f32
    %cst_30 = arith.constant 2.550000e+02 : f32
    %76 = vector.broadcast %cst_29 : f32 to vector<8x256xf32>
    %77 = arith.maximumf %76, %75 : vector<8x256xf32>
    %78 = vector.broadcast %cst_30 : f32 to vector<8x256xf32>
    %79 = arith.minimumf %78, %77 : vector<8x256xf32>
    %80 = math.roundeven %7 : vector<8x256xf32>
    %81 = vector.broadcast %55 : f32 to vector<8x256xf32>
    %82 = arith.mulf %80, %81 : vector<8x256xf32>
    %cst_31 = arith.constant 0.000000e+00 : f32
    %cst_32 = arith.constant 2.550000e+02 : f32
    %83 = vector.broadcast %cst_31 : f32 to vector<8x256xf32>
    %84 = arith.maximumf %83, %82 : vector<8x256xf32>
    %85 = vector.broadcast %cst_32 : f32 to vector<8x256xf32>
    %86 = arith.minimumf %85, %84 : vector<8x256xf32>
    %cst_33 = arith.constant 0.00392156886 : f32
    %87 = vector.broadcast %cst_33 : f32 to vector<8x256xf32>
    %88 = arith.mulf %79, %87 : vector<8x256xf32>
    %89 = arith.mulf %86, %88 : vector<8x256xf32>
    %cst_34 = arith.constant 0.0333333351 : f32
    %90 = vector.broadcast %cst_34 : f32 to vector<8x256xf32>
    %91 = arith.mulf %72, %90 : vector<8x256xf32>
    %cst_35 = arith.constant 1.000000e+00 : f32
    %92 = vector.broadcast %cst_35 : f32 to vector<8x256xf32>
    %93 = arith.addf %91, %92 : vector<8x256xf32>
    %cst_36 = arith.constant 6.000000e+00 : f32
    %94 = vector.broadcast %cst_36 : f32 to vector<8x256xf32>
    %95 = arith.remf %93, %94 : vector<8x256xf32>
    %cst_37 = arith.constant 0.000000e+00 : f32
    %96 = vector.broadcast %cst_37 : f32 to vector<8x256xf32>
    %97 = arith.cmpf one, %95, %96 : vector<8x256xf32>
    %cst_38 = arith.constant 0.000000e+00 : f32
    %98 = vector.broadcast %cst_38 : f32 to vector<8x256xf32>
    %99 = arith.cmpf olt, %95, %98 : vector<8x256xf32>
    %cst_39 = arith.constant 0.000000e+00 : f32
    %100 = arith.cmpf olt, %cst_36, %cst_39 : f32
    %101 = vector.broadcast %100 : i1 to vector<8x256xi1>
    %102 = vector.broadcast %101 : vector<8x256xi1> to vector<8x256xi1>
    %103 = arith.xori %99, %102 : vector<8x256xi1>
    %104 = arith.andi %103, %97 : vector<8x256xi1>
    %105 = vector.broadcast %cst_36 : f32 to vector<8x256xf32>
    %106 = arith.addf %95, %105 : vector<8x256xf32>
    %107 = arith.select %104, %106, %95 : vector<8x256xi1>, vector<8x256xf32>
    %cst_40 = arith.constant 4.000000e+00 : f32
    %108 = vector.broadcast %cst_40 : f32 to vector<8x256xf32>
    %109 = arith.subf %108, %107 : vector<8x256xf32>
    %110 = arith.minimumf %107, %109 : vector<8x256xf32>
    %cst_41 = arith.constant 0.000000e+00 : f32
    %cst_42 = arith.constant 1.000000e+00 : f32
    %111 = vector.broadcast %cst_41 : f32 to vector<8x256xf32>
    %112 = arith.maximumf %111, %110 : vector<8x256xf32>
    %113 = vector.broadcast %cst_42 : f32 to vector<8x256xf32>
    %114 = arith.minimumf %113, %112 : vector<8x256xf32>
    %115 = arith.mulf %89, %114 : vector<8x256xf32>
    %116 = arith.subf %86, %115 : vector<8x256xf32>
    %c0_43 = arith.constant 0 : index
    %c0_44 = arith.constant 0 : index
    %c0_45 = arith.constant 0 : index
    %c0_46 = arith.constant 0 : index
    %117 = vector.load %arg4[%c0_43, %c0_44, %c0_45, %c0_46] : memref<1x3x8x256xf32, #tpu.memory_space<vmem>>, vector<1x1x8x256xf32>
    %118 = vector.shape_cast %117 : vector<1x1x8x256xf32> to vector<8x256xf32>
    %119 = vector.shape_cast %116 : vector<8x256xf32> to vector<1x1x8x256xf32>
    tpu.vector_store %arg4[%c0_43, %c0_44, %c0_45, %c0_46], %119 {strides = array<i32>} : memref<1x3x8x256xf32, #tpu.memory_space<vmem>>, vector<1x1x8x256xf32>,
    %cst_47 = arith.constant 3.000000e+00 : f32
    %120 = vector.broadcast %cst_47 : f32 to vector<8x256xf32>
    %121 = arith.addf %91, %120 : vector<8x256xf32>
    %cst_48 = arith.constant 6.000000e+00 : f32
    %122 = vector.broadcast %cst_48 : f32 to vector<8x256xf32>
    %123 = arith.remf %121, %122 : vector<8x256xf32>
    %cst_49 = arith.constant 0.000000e+00 : f32
    %124 = vector.broadcast %cst_49 : f32 to vector<8x256xf32>
    %125 = arith.cmpf one, %123, %124 : vector<8x256xf32>
    %cst_50 = arith.constant 0.000000e+00 : f32
    %126 = vector.broadcast %cst_50 : f32 to vector<8x256xf32>
    %127 = arith.cmpf olt, %123, %126 : vector<8x256xf32>
    %cst_51 = arith.constant 0.000000e+00 : f32
    %128 = arith.cmpf olt, %cst_48, %cst_51 : f32
    %129 = vector.broadcast %128 : i1 to vector<8x256xi1>
    %130 = vector.broadcast %129 : vector<8x256xi1> to vector<8x256xi1>
    %131 = arith.xori %127, %130 : vector<8x256xi1>
    %132 = arith.andi %131, %125 : vector<8x256xi1>
    %133 = vector.broadcast %cst_48 : f32 to vector<8x256xf32>
    %134 = arith.addf %123, %133 : vector<8x256xf32>
    %135 = arith.select %132, %134, %123 : vector<8x256xi1>, vector<8x256xf32>
    %cst_52 = arith.constant 4.000000e+00 : f32
    %136 = vector.broadcast %cst_52 : f32 to vector<8x256xf32>
    %137 = arith.subf %136, %135 : vector<8x256xf32>
    %138 = arith.minimumf %135, %137 : vector<8x256xf32>
    %cst_53 = arith.constant 0.000000e+00 : f32
    %cst_54 = arith.constant 1.000000e+00 : f32
    %139 = vector.broadcast %cst_53 : f32 to vector<8x256xf32>
    %140 = arith.maximumf %139, %138 : vector<8x256xf32>
    %141 = vector.broadcast %cst_54 : f32 to vector<8x256xf32>
    %142 = arith.minimumf %141, %140 : vector<8x256xf32>
    %143 = arith.mulf %89, %142 : vector<8x256xf32>
    %144 = arith.subf %86, %143 : vector<8x256xf32>
    %c0_55 = arith.constant 0 : index
    %c1_56 = arith.constant 1 : index
    %c0_57 = arith.constant 0 : index
    %c0_58 = arith.constant 0 : index
    %145 = vector.load %arg4[%c0_55, %c1_56, %c0_57, %c0_58] : memref<1x3x8x256xf32, #tpu.memory_space<vmem>>, vector<1x1x8x256xf32>
    %146 = vector.shape_cast %145 : vector<1x1x8x256xf32> to vector<8x256xf32>
    %147 = vector.shape_cast %144 : vector<8x256xf32> to vector<1x1x8x256xf32>
    tpu.vector_store %arg4[%c0_55, %c1_56, %c0_57, %c0_58], %147 {strides = array<i32>} : memref<1x3x8x256xf32, #tpu.memory_space<vmem>>, vector<1x1x8x256xf32>,
    %cst_59 = arith.constant 5.000000e+00 : f32
    %148 = vector.broadcast %cst_59 : f32 to vector<8x256xf32>
    %149 = arith.addf %91, %148 : vector<8x256xf32>
    %cst_60 = arith.constant 6.000000e+00 : f32
    %150 = vector.broadcast %cst_60 : f32 to vector<8x256xf32>
    %151 = arith.remf %149, %150 : vector<8x256xf32>
    %cst_61 = arith.constant 0.000000e+00 : f32
    %152 = vector.broadcast %cst_61 : f32 to vector<8x256xf32>
    %153 = arith.cmpf one, %151, %152 : vector<8x256xf32>
    %cst_62 = arith.constant 0.000000e+00 : f32
    %154 = vector.broadcast %cst_62 : f32 to vector<8x256xf32>
    %155 = arith.cmpf olt, %151, %154 : vector<8x256xf32>
    %cst_63 = arith.constant 0.000000e+00 : f32
    %156 = arith.cmpf olt, %cst_60, %cst_63 : f32
    %157 = vector.broadcast %156 : i1 to vector<8x256xi1>
    %158 = vector.broadcast %157 : vector<8x256xi1> to vector<8x256xi1>
    %159 = arith.xori %155, %158 : vector<8x256xi1>
    %160 = arith.andi %159, %153 : vector<8x256xi1>
    %161 = vector.broadcast %cst_60 : f32 to vector<8x256xf32>
    %162 = arith.addf %151, %161 : vector<8x256xf32>
    %163 = arith.select %160, %162, %151 : vector<8x256xi1>, vector<8x256xf32>
    %cst_64 = arith.constant 4.000000e+00 : f32
    %164 = vector.broadcast %cst_64 : f32 to vector<8x256xf32>
    %165 = arith.subf %164, %163 : vector<8x256xf32>
    %166 = arith.minimumf %163, %165 : vector<8x256xf32>
    %cst_65 = arith.constant 0.000000e+00 : f32
    %cst_66 = arith.constant 1.000000e+00 : f32
    %167 = vector.broadcast %cst_65 : f32 to vector<8x256xf32>
    %168 = arith.maximumf %167, %166 : vector<8x256xf32>
    %169 = vector.broadcast %cst_66 : f32 to vector<8x256xf32>
    %170 = arith.minimumf %169, %168 : vector<8x256xf32>
    %171 = arith.mulf %89, %170 : vector<8x256xf32>
    %172 = arith.subf %86, %171 : vector<8x256xf32>
    %c0_67 = arith.constant 0 : index
    %c2_68 = arith.constant 2 : index
    %c0_69 = arith.constant 0 : index
    %c0_70 = arith.constant 0 : index
    %173 = vector.load %arg4[%c0_67, %c2_68, %c0_69, %c0_70] : memref<1x3x8x256xf32, #tpu.memory_space<vmem>>, vector<1x1x8x256xf32>
    %174 = vector.shape_cast %173 : vector<1x1x8x256xf32> to vector<8x256xf32>
    %175 = vector.shape_cast %172 : vector<8x256xf32> to vector<1x1x8x256xf32>
    tpu.vector_store %arg4[%c0_67, %c2_68, %c0_69, %c0_70], %175 {strides = array<i32>} : memref<1x3x8x256xf32, #tpu.memory_space<vmem>>, vector<1x1x8x256xf32>,
    return
  }
  func.func @transform_0(%arg0: i32, %arg1: i32) -> i32 {
    %c0_i32 = arith.constant 0 : i32
    %c0_i32_0 = arith.constant 0 : i32
    return %c0_i32 : i32
  }
  func.func @transform_1(%arg0: i32, %arg1: i32) -> (i32, i32, i32, i32) {
    %c0_i32 = arith.constant 0 : i32
    %c0_i32_0 = arith.constant 0 : i32
    %c0_i32_1 = arith.constant 0 : i32
    return %arg0, %c0_i32, %arg1, %c0_i32_0 : i32, i32, i32, i32
  }
  func.func @transform_2(%arg0: i32, %arg1: i32) -> (i32, i32, i32, i32) {
    %c0_i32 = arith.constant 0 : i32
    %c0_i32_0 = arith.constant 0 : i32
    %c0_i32_1 = arith.constant 0 : i32
    return %arg0, %c0_i32, %arg1, %c0_i32_0 : i32, i32, i32, i32
  }
}

</mosaic_0001>

<llo_original>
// kernel: tpu_custom_call.1
$region0: #{tpu_custom_call.1}
  #allocation0 [shape = 'u32[]', space=smem, size = 0x4, offset = 0x4, fixed_abs, tag = 'smem constant byte address 0x4 - core index']
  #allocation1 [shape = 'u32[144,128]{1,0:T(1,128)}', space=vmem, size = 0x12000, scoped, tag = 'internal scratch']
  %s0 = inlined_call_operand.hbm [shape: f32[3], index: 0, kind: input, shape index: {}]
  %s1 = inlined_call_operand.hbm [shape: f32[2,3,8,256], index: 1, kind: input, shape index: {}]
  %s2 = inlined_call_operand.hbm [shape: f32[2,3,8,256], index: 2, kind: output, shape index: {}]
  %s3 = sld [smem:[#allocation0]]
  $region49: #{tpu_custom_call.1} parent=0
    _
  %s5 = ssub.s32 1, %s3
  %s6 = scalar_select 0, %s5, %s3
  $region1: #{tpu_custom_call.1} parent=0
    #allocation2 [shape = 'u8[512]{0}', space=smem, size = 0x200, scoped, tag = 'input window, operand 0, single buffered']
    #allocation3 [shape = 's32[2]{0}', space=sflag, size = 0x8, scoped, tag = 'scoped memory for tpu_custom_call.1']
    #allocation4 [shape = 's32[2]{0}', space=sflag, size = 0x8, scoped, tag = 'scoped memory for tpu_custom_call.1']
    #allocation5 [shape = 's32[2]{0}', space=sflag, size = 0x8, scoped, tag = 'scoped memory for tpu_custom_call.1']
    #allocation6 [shape = 'u8[49152]{0}', space=vmem, size = 0xc000, scoped, tag = 'input window, operand 1']
    #allocation7 [shape = 'u8[49152]{0}', space=vmem, size = 0xc000, scoped, tag = 'output window, operand 0']
    %7 = vsyncpa [#allocation5], 0
    %8 = vsyncpa [#allocation3], 0
    %s9 = scalar_lea.sflag [#allocation3], 1
    %10 = vsyncpa %s9, 0
    %11 = vsyncpa [#allocation4], 0
    %s12 = scalar_lea.sflag [#allocation4], 1
    %13 = vsyncpa %s12, 0
    loop: start=0, step=1, limit=4
    $region2: #{tpu_custom_call.1} parent=1 // loop_pre_header
      _
    $region3: #{tpu_custom_call.1} parent=1 // loop_header
      %s15 = sphi 0, %s19
      %p16 = scmp.ge.s32.totalorder %s15, 4
      %s22 = sphi 0, %s34
      %s23 = sphi 0, %s30
      %s24 = sphi 0, %s22
      %s25 = sphi 0, %s23
      %s26 = sphi 0, %s24
      %s27 = sphi 0, %s25
      %s35 = sphi 0, %s35
      %s37 = sphi 0, %s35
      %s38 = sphi 0, %s37
      %s52 = sphi 0, %s38
      %s60 = sphi 0, %s62
      %s63 = sphi 0, %s60
      %s64 = sphi 0, %s63
      %s80 = sphi 0, %s64
      %s88 = sphi 0, %s90
      %s91 = sphi 0, %s88
      %s92 = sphi 0, %s91
      %s108 = sphi 0, %s92
    $region4: #{tpu_custom_call.1} parent=1 // loop_header_branch
      %18 = sbr.rel (%p16) target = $region8
    $region5: #{tpu_custom_call.1} parent=1 // loop_body
      %s20 = ssub.s32 %s15, 1
      %s21 = ssub.s32 %s15, 2
      %s28 = sadd.s32 1, %s23
      %p29 = scmp.ge.s32.totalorder %s28, 1
      %s30 = scalar_select %p29, 0, %s28
      %s31 = sadd.s32 1, %s22
      %s32 = scalar_select %p29, %s31, %s22
      %p33 = scmp.ge.s32.totalorder %s32, 2
      %s34 = scalar_select %p33, 0, %s32
      %s36 = sadd.s32 %s35, 1
      %p39 = scmp.eq.s32.totalorder %s15, 1
      %p40 = scmp.ne.s32.totalorder %s35, %s37
      %p41 = scmp.eq.s32.totalorder %s15, 0
      %p42 = por %p40, %p41
      %p43 = scmp.ne.s32.totalorder %s35, %s37
      %p44 = scmp.eq.s32.totalorder %s20, 1
      %p45 = por %p43, %p44
      %p46 = scmp.ne.s32.totalorder %s37, %s38
      %p47 = scmp.eq.s32.totalorder %s20, 0
      %p48 = por %p46, %p47
      %p49 = scmp.ne.s32.totalorder %s37, %s38
      %p50 = scmp.eq.s32.totalorder %s21, 1
      %p51 = por %p49, %p50
      %p53 = scmp.ne.s32.totalorder %s38, %s52
      %p54 = scmp.eq.s32.totalorder %s21, 0
      %p55 = por %p53, %p54
      %s56 = ssub.s32 %s22, %s34
      %s57 = ssub.s32 %s23, %s30
      %s58 = sor.u32 %s56, %s57
      %p59 = scmp.eq.s32.totalorder %s58, 0
      %s61 = sadd.s32 %s60, 1
      %s62 = scalar_select %p59, %s60, %s61
      %p65 = pneg %p59
      %p66 = scmp.eq.s32.totalorder %s15, 1
      %p67 = por %p65, %p66
      %p68 = scmp.ne.s32.totalorder %s60, %s63
      %p69 = scmp.eq.s32.totalorder %s15, 0
      %p70 = por %p68, %p69
      %p71 = scmp.ne.s32.totalorder %s60, %s63
      %p72 = scmp.eq.s32.totalorder %s20, 1
      %p73 = por %p71, %p72
      %p74 = scmp.ne.s32.totalorder %s63, %s64
      %p75 = scmp.eq.s32.totalorder %s20, 0
      %p76 = por %p74, %p75
      %p77 = scmp.ne.s32.totalorder %s63, %s64
      %p78 = scmp.eq.s32.totalorder %s21, 1
      %p79 = por %p77, %p78
      %p81 = scmp.ne.s32.totalorder %s64, %s80
      %p82 = scmp.eq.s32.totalorder %s21, 0
      %p83 = por %p81, %p82
      %s84 = ssub.s32 %s22, %s34
      %s85 = ssub.s32 %s23, %s30
      %s86 = sor.u32 %s84, %s85
      %p87 = scmp.eq.s32.totalorder %s86, 0
      %s89 = sadd.s32 %s88, 1
      %s90 = scalar_select %p87, %s88, %s89
      %p93 = pneg %p87
      %p94 = scmp.eq.s32.totalorder %s15, 1
      %p95 = por %p93, %p94
      %p96 = scmp.ne.s32.totalorder %s88, %s91
      %p97 = scmp.eq.s32.totalorder %s15, 0
      %p98 = por %p96, %p97
      %p99 = scmp.ne.s32.totalorder %s88, %s91
      %p100 = scmp.eq.s32.totalorder %s20, 1
      %p101 = por %p99, %p100
      %p102 = scmp.ne.s32.totalorder %s91, %s92
      %p103 = scmp.eq.s32.totalorder %s20, 0
      %p104 = por %p102, %p103
      %p105 = scmp.ne.s32.totalorder %s91, %s92
      %p106 = scmp.eq.s32.totalorder %s21, 1
      %p107 = por %p105, %p106
      %p109 = scmp.ne.s32.totalorder %s92, %s108
      %p110 = scmp.eq.s32.totalorder %s21, 0
      %p111 = por %p109, %p110
      %p112 = scmp.le.s32.totalorder 1, %s15
      %p113 = scmp.lt.s32.totalorder %s15, 3
      %p114 = pnand %p112, %p113
      %p115 = pneg %p114
      // Predicated region
      $region9: #{tpu_custom_call.1} parent=5 // pred_check
        _
      $region10: #{tpu_custom_call.1} parent=5 // pred_check_branch
        %117 = sbr.rel (%p114) target = $region12
      $region11: #{tpu_custom_call.1} parent=5 // pred_region
        %s118 = ssub.s32 %s15, 1
        // Predicated region
        $region13: #{tpu_custom_call.1} parent=11 // pred_check
          %p119 = pneg %p48
        $region14: #{tpu_custom_call.1} parent=11 // pred_check_branch
          %121 = sbr.rel (%p119) target = $region16
        $region15: #{tpu_custom_call.1} parent=11 // pred_region
          %s123 = ssub.s32 16, 16
          %124 = vsyncadd [#allocation5], %s123
          %127 = dma.hbm_to_smem %s0, 16, [#allocation2], [#allocation5]
        $region16: #{tpu_custom_call.1} parent=11 // pred_fallthru
          _
      $region12: #{tpu_custom_call.1} parent=5 // pred_fallthru
        _
      %p128 = scmp.lt.s32.totalorder %s15, 2
      // Predicated region
      $region17: #{tpu_custom_call.1} parent=5 // pred_check
        %p129 = pneg %p128
      $region18: #{tpu_custom_call.1} parent=5 // pred_check_branch
        %131 = sbr.rel (%p129) target = $region20
      $region19: #{tpu_custom_call.1} parent=5 // pred_region
        // Predicated region
        $region21: #{tpu_custom_call.1} parent=19 // pred_check
          %p132 = pneg %p70
        $region22: #{tpu_custom_call.1} parent=19 // pred_check_branch
          %134 = sbr.rel (%p132) target = $region24
        $region23: #{tpu_custom_call.1} parent=19 // pred_region
          %s135 = sand.u32 %s60, 1
          %s136 = scalar_lea.sflag [#allocation3], %s135
          %s137 = sand.u32 %s60, 1
          %s138 = smul.addr %s137, 48
          %s139 = scalar_lea.vmem [#allocation6], %s138
          %s141 = ssub.s32 768, 768
          %142 = vsyncadd %s136, %s141
          %s143 = smul.addr %s23, 2
          %s144 = smul.addr %s22, 6
          %s145 = sadd.s32 %s143, %s144
          %s146 = smul.addr %s145, 128
          %s147 = scalar_lea.hbm %s1, %s146
          %s148 = sshll.u32 %s139, 4
          %s149 = int_to_ptr.vmem [resolvable:$true] %s148
          %154 = dma.hbm_to_vmem [thread:$0]  %s147, 768, %s149, %s136, 256, 256, 16
        $region24: #{tpu_custom_call.1} parent=19 // pred_fallthru
          _
      $region20: #{tpu_custom_call.1} parent=5 // pred_fallthru
        _
      %p155 = scmp.le.s32.totalorder 1, %s15
      %p156 = scmp.lt.s32.totalorder %s15, 3
      %p157 = pnand %p155, %p156
      %p158 = pneg %p157
      // Predicated region
      $region25: #{tpu_custom_call.1} parent=5 // pred_check
        _
      $region26: #{tpu_custom_call.1} parent=5 // pred_check_branch
        %160 = sbr.rel (%p157) target = $region28
      $region27: #{tpu_custom_call.1} parent=5 // pred_region
        %s161 = ssub.s32 %s15, 1
        // Predicated region
        $region29: #{tpu_custom_call.1} parent=27 // pred_check
          %p162 = pneg %p48
        $region30: #{tpu_custom_call.1} parent=27 // pred_check_branch
          %164 = sbr.rel (%p162) target = $region32
        $region31: #{tpu_custom_call.1} parent=27 // pred_region
          %165 = dma.done [#allocation5], 16
        $region32: #{tpu_custom_call.1} parent=27 // pred_fallthru
          _
        %s166 = sand.u32 %s63, 1
        %s167 = scalar_lea.sflag [#allocation3], %s166
        %s168 = sand.u32 %s63, 1
        %s169 = smul.addr %s168, 48
        %s170 = scalar_lea.vmem [#allocation6], %s169
        // Predicated region
        $region33: #{tpu_custom_call.1} parent=27 // pred_check
          %p171 = pneg %p76
        $region34: #{tpu_custom_call.1} parent=27 // pred_check_branch
          %173 = sbr.rel (%p171) target = $region36
        $region35: #{tpu_custom_call.1} parent=27 // pred_region
          %174 = dma.done %s167, 768
        $region36: #{tpu_custom_call.1} parent=27 // pred_fallthru
          _
        %175 = sfence
        %p176 = pneg %p48
        %p177 = pneg %p45
        %s178 = sand.u32 %s63, 1
        %s179 = scalar_lea.sflag [#allocation3], %s178
        %s180 = sand.u32 %s63, 1
        %s181 = smul.addr %s180, 48
        %s182 = scalar_lea.vmem [#allocation6], %s181
        %p183 = pneg %p76
        %p184 = pneg %p73
        %p185 = pneg %p104
        %p186 = pneg %p101
        %s187 = sand.u32 %s91, 1
        %s188 = scalar_lea.sflag [#allocation4], %s187
        %s189 = sand.u32 %s91, 1
        %s190 = smul.addr %s189, 48
        %s191 = scalar_lea.vmem [#allocation7], %s190
        %v192 = vld [vmem:[%s170] sm:$0xff]
        %v193 = vld [vmem:[%s170 + $0x8] sm:$0xff]
        %s194 = scalar_lea.vmem %s170, 16 [#allocation6]
        %v195 = vld [vmem:[%s194] sm:$0xff]
        %v196 = vld [vmem:[%s194 + $0x8] sm:$0xff]
        %s197 = scalar_lea.vmem %s170, 32 [#allocation6]
        %v198 = vld [vmem:[%s197] sm:$0xff]
        %v199 = vld [vmem:[%s197 + $0x8] sm:$0xff]
        %v200 = vmax.f32 %v192, %v195
        %v201 = vmax.f32 %v193, %v196
        %v202 = vmax.f32 %v200, %v198
        %v203 = vmax.f32 %v201, %v199
        %v204 = vmin.f32 %v192, %v195
        %v205 = vmin.f32 %v193, %v196
        %v206 = vmin.f32 %v204, %v198
        %v207 = vmin.f32 %v205, %v199
        %v208 = vsub.f32 %v202, %v206
        %v209 = vsub.f32 %v203, %v207
        %vm210 = vcmp.eq.f32.partialorder %v208, 0.0
        %vm211 = vcmp.eq.f32.partialorder %v209, 0.0
        %v212 = vsel %vm210, 1.0, %v208
        %v213 = vsel %vm211, 1.0, %v209
        %vm214 = vcmp.eq.f32.partialorder %v202, 0.0
        %vm215 = vcmp.eq.f32.partialorder %v203, 0.0
        %v216 = vsel %vm214, 1.0, %v202
        %v217 = vsel %vm215, 1.0, %v203
        %v218 = vrcp.pop %v212
        %v219 = vrcp.pop %v213
        %v220 = vrcp.pop %v216
        %v221 = vrcp.pop %v217
        %v222 = vmul.f32 %v220, 255.0
        %v223 = vmul.f32 %v221, 255.0
        %v224 = vmul.f32 %v208, %v222
        %v225 = vmul.f32 %v209, %v223
        %v226 = vsel %vm214, 0.0, %v224
        %v227 = vsel %vm215, 0.0, %v225
        %vm228 = vcmp.eq.f32.partialorder %v202, %v198
        %vm229 = vcmp.eq.f32.partialorder %v203, %v199
        %v230 = vsub.f32 %v195, %v192
        %v231 = vsub.f32 %v196, %v193
        %v232 = vmul.f32 %v230, %v218
        %v233 = vmul.f32 %v231, %v219
        %vm234 = vcmp.eq.f32.partialorder %v202, %v195
        %vm235 = vcmp.eq.f32.partialorder %v203, %v196
        %v236 = vsub.f32 %v192, %v198
        %v237 = vsub.f32 %v193, %v199
        %v238 = vmul.f32 %v236, %v218
        %v239 = vmul.f32 %v237, %v219
        %v240 = vadd.f32 %v238, 2.0
        %v241 = vadd.f32 %v239, 2.0
        %v242 = vsub.f32 %v198, %v195
        %v243 = vsub.f32 %v199, %v196
        %v244 = vmul.f32 %v242, %v218
        %v245 = vmul.f32 %v243, %v219
        %v246 = vadd.f32 %v244, 4.0
        %v247 = vadd.f32 %v245, 4.0
        %v248 = vsel %vm234, %v240, %v246
        %v249 = vsel %vm235, %v241, %v247
        %v250 = vsel %vm228, %v232, %v248
        %v251 = vsel %vm229, %v233, %v249
        %v252 = vsel %vm210, 0.0, %v250
        %v253 = vsel %vm211, 0.0, %v251
        %v254 = vmul.f32 %v252, 30.0
        %v255 = vmul.f32 %v253, 30.0
        %vm256 = vcmp.lt.f32.partialorder %v254, 0.0
        %vm257 = vcmp.lt.f32.partialorder %v255, 0.0
        %v258 = vadd.f32 %v254, 180.0
        %v259 = vadd.f32 %v255, 180.0
        %v260 = vsel %vm256, %v258, %v254
        %v261 = vsel %vm257, %v259, %v255
        %s262 = sld [smem:[#allocation2]]
        %s263 = sld [smem:[#allocation2 + $0x1]]
        %s264 = sld [smem:[#allocation2 + $0x2]]
        %v265 = vround.ne.pseudo %v260
        %v266 = vround.ne.pseudo %v261
        %v267 = vstv %s262
        %v268 = vmul.f32 %v265, %v267
        %v269 = vmul.f32 %v266, %v267
        %v270 = vand.u32 2147483647, %v268
        %v271 = vrcp.pop 180.0
        %v272 = vmul.f32 %v270, %v271
        %v273 = vfloor.f32 %v272
        %v274 = vmul.f32 %v273, 180.0
        %v275 = vsub.f32 %v270, %v274
        %vm276 = vcmp.eq.f32.partialorder %v275, 180.0
        %v277 = vsel %vm276, 0.0, %v275
        %v278 = vand.u32 2147483647, %v277
        %v279 = vand.u32 %v268, 2147483648
        %v280 = vor.u32 %v278, %v279
        %v281 = vand.u32 2147483647, %v269
        %v282 = vrcp.pop 180.0
        %v283 = vmul.f32 %v281, %v282
        %v284 = vfloor.f32 %v283
        %v285 = vmul.f32 %v284, 180.0
        %v286 = vsub.f32 %v281, %v285
        %vm287 = vcmp.eq.f32.partialorder %v286, 180.0
        %v288 = vsel %vm287, 0.0, %v286
        %v289 = vand.u32 2147483647, %v288
        %v290 = vand.u32 %v269, 2147483648
        %v291 = vor.u32 %v289, %v290
        %vm292 = vcmp.ne.f32.partialorder %v280, 0.0
        %vm293 = vcmp.ne.f32.partialorder %v291, 0.0
        %vm294 = vcmp.lt.f32.partialorder %v280, 0.0
        %vm295 = vcmp.lt.f32.partialorder %v291, 0.0
        %vm296 = vmand %vm294, %vm292
        %vm297 = vmand %vm295, %vm293
        %v298 = vadd.f32 %v280, 180.0
        %v299 = vadd.f32 %v291, 180.0
        %v300 = vsel %vm296, %v298, %v280
        %v301 = vsel %vm297, %v299, %v291
        %v302 = vround.ne.pseudo %v226
        %v303 = vround.ne.pseudo %v227
        %v304 = vstv %s263
        %v305 = vmul.f32 %v302, %v304
        %v306 = vmul.f32 %v303, %v304
        %v307 = vmax.f32 %v305, 0.0
        %v308 = vmax.f32 %v306, 0.0
        %v309 = vmin.f32 %v307, 255.0
        %v310 = vmin.f32 %v308, 255.0
        %v311 = vround.ne.pseudo %v202
        %v312 = vround.ne.pseudo %v203
        %v313 = vstv %s264
        %v314 = vmul.f32 %v311, %v313
        %v315 = vmul.f32 %v312, %v313
        %v316 = vmax.f32 %v314, 0.0
        %v317 = vmax.f32 %v315, 0.0
        %v318 = vmin.f32 %v316, 255.0
        %v319 = vmin.f32 %v317, 255.0
        %v320 = vmul.f32 %v309, 0.003921569
        %v321 = vmul.f32 %v310, 0.003921569
        %v322 = vmul.f32 %v318, %v320
        %v323 = vmul.f32 %v319, %v321
        %v324 = vmul.f32 %v300, 0.033333335
        %v325 = vmul.f32 %v301, 0.033333335
        %v326 = vadd.f32 %v324, 1.0
        %v327 = vadd.f32 %v325, 1.0
        %v328 = vand.u32 2147483647, %v326
        %v329 = vrcp.pop 6.0
        %v330 = vmul.f32 %v328, %v329
        %v331 = vfloor.f32 %v330
        %v332 = vmul.f32 %v331, 6.0
        %v333 = vsub.f32 %v328, %v332
        %vm334 = vcmp.eq.f32.partialorder %v333, 6.0
        %v335 = vsel %vm334, 0.0, %v333
        %v336 = vand.u32 2147483647, %v335
        %v337 = vand.u32 %v326, 2147483648
        %v338 = vor.u32 %v336, %v337
        %v339 = vand.u32 2147483647, %v327
        %v340 = vrcp.pop 6.0
        %v341 = vmul.f32 %v339, %v340
        %v342 = vfloor.f32 %v341
        %v343 = vmul.f32 %v342, 6.0
        %v344 = vsub.f32 %v339, %v343
        %vm345 = vcmp.eq.f32.partialorder %v344, 6.0
        %v346 = vsel %vm345, 0.0, %v344
        %v347 = vand.u32 2147483647, %v346
        %v348 = vand.u32 %v327, 2147483648
        %v349 = vor.u32 %v347, %v348
        %vm350 = vcmp.ne.f32.partialorder %v338, 0.0
        %vm351 = vcmp.ne.f32.partialorder %v349, 0.0
        %vm352 = vcmp.lt.f32.partialorder %v338, 0.0
        %vm353 = vcmp.lt.f32.partialorder %v349, 0.0
        %vm354 = vmand %vm352, %vm350
        %vm355 = vmand %vm353, %vm351
        %v356 = vadd.f32 %v338, 6.0
        %v357 = vadd.f32 %v349, 6.0
        %v358 = vsel %vm354, %v356, %v338
        %v359 = vsel %vm355, %v357, %v349
        %v360 = vsub.f32 4.0, %v358
        %v361 = vsub.f32 4.0, %v359
        %v362 = vmin.f32 %v358, %v360
        %v363 = vmin.f32 %v359, %v361
        %v364 = vmax.f32 %v362, 0.0
        %v365 = vmax.f32 %v363, 0.0
        %v366 = vmin.f32 %v364, 1.0
        %v367 = vmin.f32 %v365, 1.0
        %v368 = vmul.f32 %v322, %v366
        %v369 = vmul.f32 %v323, %v367
        %v370 = vsub.f32 %v318, %v368
        %v371 = vsub.f32 %v319, %v369
        %372 = vst [vmem:[%s191] sm:$0xff] %v370
        %373 = vst [vmem:[%s191 + $0x8] sm:$0xff] %v371
        %v374 = vadd.f32 %v324, 3.0
        %v375 = vadd.f32 %v325, 3.0
        %v376 = vand.u32 2147483647, %v374
        %v377 = vrcp.pop 6.0
        %v378 = vmul.f32 %v376, %v377
        %v379 = vfloor.f32 %v378
        %v380 = vmul.f32 %v379, 6.0
        %v381 = vsub.f32 %v376, %v380
        %vm382 = vcmp.eq.f32.partialorder %v381, 6.0
        %v383 = vsel %vm382, 0.0, %v381
        %v384 = vand.u32 2147483647, %v383
        %v385 = vand.u32 %v374, 2147483648
        %v386 = vor.u32 %v384, %v385
        %v387 = vand.u32 2147483647, %v375
        %v388 = vrcp.pop 6.0
        %v389 = vmul.f32 %v387, %v388
        %v390 = vfloor.f32 %v389
        %v391 = vmul.f32 %v390, 6.0
        %v392 = vsub.f32 %v387, %v391
        %vm393 = vcmp.eq.f32.partialorder %v392, 6.0
        %v394 = vsel %vm393, 0.0, %v392
        %v395 = vand.u32 2147483647, %v394
        %v396 = vand.u32 %v375, 2147483648
        %v397 = vor.u32 %v395, %v396
        %vm398 = vcmp.ne.f32.partialorder %v386, 0.0
        %vm399 = vcmp.ne.f32.partialorder %v397, 0.0
        %vm400 = vcmp.lt.f32.partialorder %v386, 0.0
        %vm401 = vcmp.lt.f32.partialorder %v397, 0.0
        %vm402 = vmand %vm400, %vm398
        %vm403 = vmand %vm401, %vm399
        %v404 = vadd.f32 %v386, 6.0
        %v405 = vadd.f32 %v397, 6.0
        %v406 = vsel %vm402, %v404, %v386
        %v407 = vsel %vm403, %v405, %v397
        %v408 = vsub.f32 4.0, %v406
        %v409 = vsub.f32 4.0, %v407
        %v410 = vmin.f32 %v406, %v408
        %v411 = vmin.f32 %v407, %v409
        %v412 = vmax.f32 %v410, 0.0
        %v413 = vmax.f32 %v411, 0.0
        %v414 = vmin.f32 %v412, 1.0
        %v415 = vmin.f32 %v413, 1.0
        %v416 = vmul.f32 %v322, %v414
        %v417 = vmul.f32 %v323, %v415
        %v418 = vsub.f32 %v318, %v416
        %v419 = vsub.f32 %v319, %v417
        %s420 = scalar_lea.vmem %s191, 16 [#allocation7]
        %421 = vst [vmem:[%s420] sm:$0xff] %v418
        %422 = vst [vmem:[%s420 + $0x8] sm:$0xff] %v419
        %v423 = vadd.f32 %v324, 5.0
        %v424 = vadd.f32 %v325, 5.0
        %v425 = vand.u32 2147483647, %v423
        %v426 = vrcp.pop 6.0
        %v427 = vmul.f32 %v425, %v426
        %v428 = vfloor.f32 %v427
        %v429 = vmul.f32 %v428, 6.0
        %v430 = vsub.f32 %v425, %v429
        %vm431 = vcmp.eq.f32.partialorder %v430, 6.0
        %v432 = vsel %vm431, 0.0, %v430
        %v433 = vand.u32 2147483647, %v432
        %v434 = vand.u32 %v423, 2147483648
        %v435 = vor.u32 %v433, %v434
        %v436 = vand.u32 2147483647, %v424
        %v437 = vrcp.pop 6.0
        %v438 = vmul.f32 %v436, %v437
        %v439 = vfloor.f32 %v438
        %v440 = vmul.f32 %v439, 6.0
        %v441 = vsub.f32 %v436, %v440
        %vm442 = vcmp.eq.f32.partialorder %v441, 6.0
        %v443 = vsel %vm442, 0.0, %v441
        %v444 = vand.u32 2147483647, %v443
        %v445 = vand.u32 %v424, 2147483648
        %v446 = vor.u32 %v444, %v445
        %vm447 = vcmp.ne.f32.partialorder %v435, 0.0
        %vm448 = vcmp.ne.f32.partialorder %v446, 0.0
        %vm449 = vcmp.lt.f32.partialorder %v435, 0.0
        %vm450 = vcmp.lt.f32.partialorder %v446, 0.0
        %vm451 = vmand %vm449, %vm447
        %vm452 = vmand %vm450, %vm448
        %v453 = vadd.f32 %v435, 6.0
        %v454 = vadd.f32 %v446, 6.0
        %v455 = vsel %vm451, %v453, %v435
        %v456 = vsel %vm452, %v454, %v446
        %v457 = vsub.f32 4.0, %v455
        %v458 = vsub.f32 4.0, %v456
        %v459 = vmin.f32 %v455, %v457
        %v460 = vmin.f32 %v456, %v458
        %v461 = vmax.f32 %v459, 0.0
        %v462 = vmax.f32 %v460, 0.0
        %v463 = vmin.f32 %v461, 1.0
        %v464 = vmin.f32 %v462, 1.0
        %v465 = vmul.f32 %v322, %v463
        %v466 = vmul.f32 %v323, %v464
        %v467 = vsub.f32 %v318, %v465
        %v468 = vsub.f32 %v319, %v466
        %s469 = scalar_lea.vmem %s191, 32 [#allocation7]
        %470 = vst [vmem:[%s469] sm:$0xff] %v467
        %471 = vst [vmem:[%s469 + $0x8] sm:$0xff] %v468
        %s472 = sand.u32 %s91, 1
        %s473 = scalar_lea.sflag [#allocation4], %s472
        %s474 = sand.u32 %s91, 1
        %s475 = smul.addr %s474, 48
        %s476 = scalar_lea.vmem [#allocation7], %s475
        // Predicated region
        $region37: #{tpu_custom_call.1} parent=27 // pred_check
          %p477 = pneg %p101
        $region38: #{tpu_custom_call.1} parent=27 // pred_check_branch
          %479 = sbr.rel (%p477) target = $region40
        $region39: #{tpu_custom_call.1} parent=27 // pred_region
          %s481 = ssub.s32 768, 768
          %482 = vsyncadd %s473, %s481
          %s483 = smul.addr %s25, 2
          %s484 = smul.addr %s24, 6
          %s485 = sadd.s32 %s483, %s484
          %s486 = smul.addr %s485, 128
          %s487 = scalar_lea.hbm %s2, %s486
          %s488 = sshll.u32 %s476, 4
          %s489 = int_to_ptr.vmem [resolvable:$true] %s488
          %494 = dma.vmem_to_hbm [thread:$0]  %s489, 768, %s487, %s473, 256, 256, 16
        $region40: #{tpu_custom_call.1} parent=27 // pred_fallthru
          _
      $region28: #{tpu_custom_call.1} parent=5 // pred_fallthru
        _
      %p495 = scmp.le.s32.totalorder 2, %s15
      // Predicated region
      $region41: #{tpu_custom_call.1} parent=5 // pred_check
        %p496 = pneg %p495
      $region42: #{tpu_custom_call.1} parent=5 // pred_check_branch
        %498 = sbr.rel (%p496) target = $region44
      $region43: #{tpu_custom_call.1} parent=5 // pred_region
        %s499 = ssub.s32 %s15, 2
        // Predicated region
        $region45: #{tpu_custom_call.1} parent=43 // pred_check
          %p500 = pneg %p107
        $region46: #{tpu_custom_call.1} parent=43 // pred_check_branch
          %502 = sbr.rel (%p500) target = $region48
        $region47: #{tpu_custom_call.1} parent=43 // pred_region
          %s503 = sand.u32 %s92, 1
          %s504 = scalar_lea.sflag [#allocation4], %s503
          %s505 = sand.u32 %s92, 1
          %s506 = smul.addr %s505, 48
          %s507 = scalar_lea.vmem [#allocation7], %s506
          %508 = dma.done %s504, 768
        $region48: #{tpu_custom_call.1} parent=43 // pred_fallthru
          _
      $region44: #{tpu_custom_call.1} parent=5 // pred_fallthru
        _
    $region6: #{tpu_custom_call.1} parent=1 // loop_footer
      %s19 = sadd.s32 1, %s15
    $region7: #{tpu_custom_call.1} parent=1 // loop_footer_branch
      %14 = sbr.rel target = $region3
    $region8: #{tpu_custom_call.1} parent=1 // loop_exit
      _
    %509 = vsyncpa [#allocation3], 1
    %s510 = scalar_lea.sflag [#allocation3], 1
    %511 = vsyncpa %s510, 1
    %512 = vsyncpa [#allocation4], 1
    %s513 = scalar_lea.sflag [#allocation4], 1
    %514 = vsyncpa %s513, 1
    %515 = vsyncpa [#allocation5], 1
    %s516 = scalar_lea.sflag [#allocation5], 1
    %517 = vsyncpa %s516, 1

</llo_original>
